<compile_context>
chip_gen: v5e
topology: v5e:2x2
jax: 0.10.0
libtpu: 0.0.40
codegen_flags: <defaults>
</compile_context>

<pallas_src>
import functools

import jax
import jax.numpy as jnp
from jax.experimental import pallas as pl
from jax.experimental.pallas import tpu as pltpu

_BF16 = jnp.bfloat16
_F32 = jnp.float32


# -----------------------------------------------------------------------------
# Fused forward kernel (grid-free; lane axis = b*N + n, batch-major node-minor)
# -----------------------------------------------------------------------------
def _lightts_fused_kernel(
    xt_ref,        # (T, L)       bf16   xt[t, b*N+n]      = x[b, t, n]
    x2w_ref,       # (nc, cs, L)  bf16   x2w[m, i, b*N+n]  = x[b, i*nc + m, n]
    arw_ref, arb_ref,                       # (pred, T) bf16, (pred, 1) f32
    # branch 1 (IEBlock layer_1 with chunk_proj_1 folded in, g folded into w2)
    w11_ref, b11_ref, w21g_ref, b21e_ref, wo1_ref, v1_ref,
    # branch 2 (IEBlock layer_2 with chunk_proj_2 folded in, g folded into w2)
    w12_ref, b12_ref, w22g_ref, b22e_ref, wo2_ref, v2_ref,
    # layer_3 IEBlock (w13 split so the concat never materializes)
    w13a_ref, w13b_ref, b13_ref, w23_ref, b23_ref, wo3_ref, bo3_ref,
    m3t_ref,       # (L, L)         bf16   kron(I_B, (I + wc3).T)
    bc3l_ref,      # (1, L)         f32    bc3 broadcast over batch lanes
    pmt_ref,       # (L, B*c_out)   bf16   kron(I_B, pw.T)
    pbl_ref,       # (1, B*c_out)   f32    pb broadcast over batch lanes
    o_ref,         # (pred, B*c_out) f32   lane-dense output
):
    nc, cs, L = x2w_ref.shape

    def leaky(h):                      # LeakyReLU(0.01); exact for slope < 1
        return jnp.maximum(h, 0.01 * h)

    def dot(a, b):                     # bf16 MXU operands, f32 accumulation
        return jnp.dot(a.astype(_BF16), b.astype(_BF16),
                       preferred_element_type=_F32)

    xt = xt_ref[...]                   # (T, L) bf16, shared by branch 1 + highway

    def branch(chunk, w1_ref, b1_ref, w2g_ref, b2e_ref, wo_ref, v_ref):
        # IEBlock(layer_1/2) with chunk_proj folded through its linear tail:
        #   z = sum_m (g[m]*w2) @ LeakyReLU(w1 @ x_m + b1) + b2e ; r = wo @ z + v
        z = b2e_ref[...]
        for m in range(nc):            # nc is small; unrolled at trace time
            hm = leaky(dot(w1_ref[...], chunk(m)) + b1_ref[...])
            z = z + dot(w2g_ref[m], hm)
        return dot(wo_ref[...], z) + v_ref[...]                    # (d4, L) f32

    # branch 1: contiguous-time chunks are plain sublane slices of xt
    r1 = branch(lambda m: xt[m * cs:(m + 1) * cs, :],
                w11_ref, b11_ref, w21g_ref, b21e_ref, wo1_ref, v1_ref)
    # branch 2: strided chunks, pre-permuted wrapper-side
    r2 = branch(lambda m: x2w_ref[m],
                w12_ref, b12_ref, w22g_ref, b22e_ref, wo2_ref, v2_ref)

    # layer_3 IEBlock; concat([x1, x2]) folded by splitting w13 (exact math).
    h3 = leaky(dot(w13a_ref[...], r1) + dot(w13b_ref[...], r2) + b13_ref[...])
    s3 = dot(w23_ref[...], h3) + b23_ref[...]                      # (q3, L)
    # channel_proj residual as ONE matmul against the block-diagonal mix matrix.
    u3 = dot(s3, m3t_ref[...]) + bc3l_ref[...]                     # (q3, L)
    o3 = dot(wo3_ref[...], u3) + bo3_ref[...]                      # (pred, L)

    # highway (AR) branch + residual
    hw = dot(arw_ref[...], xt) + arb_ref[...]                      # (pred, L)
    out = o3 + hw                                                  # (pred, L) f32

    # OutputBlock projection: one lane-dense matmul + single full-block store.
    o_ref[...] = (dot(out, pmt_ref[...]) + pbl_ref[...]).astype(o_ref.dtype)


# -----------------------------------------------------------------------------
# JAX wrapper: layout prep + parameter folding + single pallas_call
# -----------------------------------------------------------------------------
@functools.partial(jax.jit, static_argnames=("chunk_size",))
def lightts_forward(x_enc, params, *, chunk_size):
    B, T, N = x_enc.shape
    cs = chunk_size
    nc = T // cs   # TODO(synk): seq_len % chunk_size != 0 (ConstantPad1d branch) not implemented.
    L = B * N      # lane axis = b*N + n (batch-major, node-minor)

    bf = lambda a: a.astype(_BF16)
    col = lambda a: a.astype(_F32).reshape(-1, 1)

    # Activation layouts (two copies of x total: xt and the strided x2w).
    xt = bf(jnp.transpose(x_enc, (1, 0, 2)).reshape(T, L))             # xt[t, bN+n]
    x2w = bf(jnp.transpose(x_enc.reshape(B, cs, nc, N),
                           (2, 1, 0, 3)).reshape(nc, cs, L))            # x2w[m, i, bN+n]

    # Fold chunk_proj (Linear(nc,1)) through the linear tail of IEBlock 1/2;
    # the per-chunk weights g[m] are folded into per-chunk copies of w2.
    def fold_branch(p, cp_w, cp_b):
        w1, b1, w2, b2, wc, bc, wo, bo = p
        cpw = cp_w[0]                                    # (nc,)
        g = cpw + wc.T @ cpw                             # g[m] = cpw[m] + sum_n cpw[n]*wc[n,m]
        w2g = bf(g[:, None, None] * w2[None, :, :])      # (nc, h4, hid)
        b2e = (jnp.sum(g) * b2 + jnp.dot(cpw, bc)).astype(_F32).reshape(-1, 1)
        v = (jnp.sum(cpw) * bo + cp_b[0]).astype(_F32).reshape(-1, 1)
        return bf(w1), col(b1), w2g, b2e, bf(wo), v

    br1 = fold_branch(params["l1"], params["cp1_w"], params["cp1_b"])
    br2 = fold_branch(params["l2"], params["cp2_w"], params["cp2_b"])

    w13, b13, w23, b23, wc3, bc3, wo3, bo3 = params["l3"]
    d4 = params["l1"][6].shape[0]                        # d_model // 4 = branch output width
    w13a, w13b = bf(w13[:, :d4]), bf(w13[:, d4:])        # concat fold

    # layer_3 channel_proj residual as block-diagonal lane mixing: kron(I_B, (I+wc3).T)
    eyeB = jnp.eye(B, dtype=_F32)
    m3t = bf(jnp.kron(eyeB, (jnp.eye(N, dtype=_F32) + wc3).T))          # (L, L)
    bc3l = jnp.tile(bc3.astype(_F32), B).reshape(1, L)

    # OutputBlock Linear(enc_in, c_out) as a lane-dense matmul: kron(I_B, pw.T)
    # TODO(synk): OutputBlock source not provided; modeled as Dropout(identity at
    # inference) + channel-wise Linear(enc_in, c_out).
    pw, pb = params["proj_w"], params["proj_b"]
    c_out = pw.shape[0]
    pmt = bf(jnp.kron(eyeB, pw.T.astype(_F32)))                         # (L, B*c_out)
    pbl = jnp.tile(pb.astype(_F32), B).reshape(1, B * c_out)

    arw, arb = params["ar_w"], params["ar_b"]
    pred = arw.shape[0]

    args = (xt, x2w, bf(arw), col(arb),
            *br1, *br2,
            w13a, w13b, col(b13), bf(w23), col(b23), bf(wo3), col(bo3),
            m3t, bc3l, pmt, pbl)

    hid = params["l1"][0].shape[0]
    h4 = params["l1"][2].shape[0]
    hid3 = w13.shape[0]
    q3 = w23.shape[0]
    flops = 2 * L * (2 * nc * (hid * cs + h4 * hid) + 2 * d4 * h4
                     + 2 * hid3 * d4 + q3 * hid3 + q3 * L + pred * q3
                     + pred * T + pred * B * c_out)
    bytes_accessed = (sum(int(a.size) * a.dtype.itemsize for a in args)
                      + pred * B * c_out * 4)

    vmem = pl.BlockSpec(memory_space=pltpu.MemorySpace.VMEM)
    out = pl.pallas_call(
        _lightts_fused_kernel,
        out_shape=jax.ShapeDtypeStruct((pred, B * c_out), _F32),
        in_specs=[vmem] * len(args),
        out_specs=vmem,
        cost_estimate=pl.CostEstimate(flops=int(flops), transcendentals=0,
                                      bytes_accessed=int(bytes_accessed)),
    )(*args)

    # (pred, B*c_out) -> (B, pred, c_out): tiny one-time transpose wrapper-side.
    return jnp.transpose(out.reshape(pred, B, c_out), (1, 0, 2))


# -----------------------------------------------------------------------------
# Pure-JAX reference (literal PyTorch math, f32) for verification
# -----------------------------------------------------------------------------
def _ieblock_ref(x, p):
    w1, b1, w2, b2, wc, bc, wo, bo = p
    xt = jnp.swapaxes(x, 1, 2)
    h = xt @ w1.T + b1
    h = jnp.where(h >= 0, h, 0.01 * h)
    s = h @ w2.T + b2
    sp = jnp.swapaxes(s, 1, 2)
    c = sp @ wc.T + bc
    u = sp + c
    o = jnp.swapaxes(u, 1, 2) @ wo.T + bo
    return jnp.swapaxes(o, 1, 2)


def lightts_reference(x_enc, params, *, chunk_size):
    B, T, N = x_enc.shape
    num_chunks = T // chunk_size
    highway = jnp.swapaxes(x_enc, 1, 2) @ params["ar_w"].T + params["ar_b"]
    highway = jnp.swapaxes(highway, 1, 2)
    x1 = x_enc.reshape(B, num_chunks, chunk_size, N)
    x1 = jnp.transpose(x1, (0, 3, 2, 1)).reshape(-1, chunk_size, num_chunks)
    x1 = _ieblock_ref(x1, params["l1"])
    x1 = (x1 @ params["cp1_w"].T + params["cp1_b"])[..., 0]
    x2 = x_enc.reshape(B, chunk_size, num_chunks, N)
    x2 = jnp.transpose(x2, (0, 3, 1, 2)).reshape(-1, chunk_size, num_chunks)
    x2 = _ieblock_ref(x2, params["l2"])
    x2 = (x2 @ params["cp2_w"].T + params["cp2_b"])[..., 0]
    x3 = jnp.concatenate([x1, x2], axis=-1).reshape(B, N, -1)
    x3 = jnp.swapaxes(x3, 1, 2)
    out = _ieblock_ref(x3, params["l3"]) + highway
    return out @ params["proj_w"].T + params["proj_b"]


# -----------------------------------------------------------------------------
# Deterministic parameter construction
# -----------------------------------------------------------------------------
def _lin_init(key, out_f, in_f, scale=0.1):
    kw, kb = jax.random.split(key)
    w = scale * jax.random.normal(kw, (out_f, in_f), jnp.float32)
    b = scale * jax.random.normal(kb, (out_f,), jnp.float32)
    return w, b


def _ieblock_init(key, input_dim, hid_dim, output_dim, num_node):
    k1, k2, k3, k4 = jax.random.split(key, 4)
    w1, b1 = _lin_init(k1, hid_dim, input_dim)
    w2, b2 = _lin_init(k2, hid_dim // 4, hid_dim)
    wc = jnp.eye(num_node, dtype=jnp.float32)          # torch.nn.init.eye_
    _, bc = _lin_init(k3, num_node, num_node)
    wo, bo = _lin_init(k4, output_dim, hid_dim // 4)
    return (w1, b1, w2, b2, wc, bc, wo, bo)


def init_params(key, *, seq_len, pred_len, chunk_size, d_model, enc_in, c_out):
    num_chunks = seq_len // chunk_size
    keys = jax.random.split(key, 8)
    ar_w, ar_b = _lin_init(keys[0], pred_len, seq_len)
    cp1_w, cp1_b = _lin_init(keys[1], 1, num_chunks)
    cp2_w, cp2_b = _lin_init(keys[2], 1, num_chunks)
    proj_w, proj_b = _lin_init(keys[3], c_out, enc_in)
    return {
        "ar_w": ar_w, "ar_b": ar_b,
        "l1": _ieblock_init(keys[4], chunk_size, d_model // 4, d_model // 4, num_chunks),
        "cp1_w": cp1_w, "cp1_b": cp1_b,
        "l2": _ieblock_init(keys[5], chunk_size, d_model // 4, d_model // 4, num_chunks),
        "cp2_w": cp2_w, "cp2_b": cp2_b,
        "l3": _ieblock_init(keys[6], d_model // 2, d_model // 2, pred_len, enc_in),
        "proj_w": proj_w, "proj_b": proj_b,
    }


# -----------------------------------------------------------------------------
if __name__ == "__main__":
    SEQ_LEN = 8
    CHUNK_SIZE = 4          # seq_len % chunk_size == 0 -> no ConstantPad1d branch
    D_MODEL = 32
    ENC_IN = 4
    C_OUT = 4
    B = 2

    key = jax.random.PRNGKey(0)
    k_params, k_x = jax.random.split(key)
    params = init_params(k_params, seq_len=SEQ_LEN, pred_len=SEQ_LEN,
                         chunk_size=CHUNK_SIZE, d_model=D_MODEL,
                         enc_in=ENC_IN, c_out=C_OUT)
    x_enc = jax.random.normal(k_x, (B, SEQ_LEN, ENC_IN), jnp.float32)
    # x_mark_enc / x_dec / x_mark_dec are unused by this model's forward.

    out = lightts_forward(x_enc, params, chunk_size=CHUNK_SIZE)
    out = jax.block_until_ready(out)

    ref = lightts_reference(x_enc, params, chunk_size=CHUNK_SIZE)
    assert out.shape == (B, SEQ_LEN, C_OUT), out.shape
    err = float(jnp.max(jnp.abs(out - ref)))
    # bf16 MXU operands vs. f32 reference -> relaxed tolerance.
    assert err < 3e-2, f"max abs err {err}"

    print("KERNEL_OK")
</pallas_src>

<mosaic_0001>
module attributes {stable_mosaic.version = 11 : i64} {
  func.func @_lightts_fused_kernel(%arg0: memref<8x8xbf16, #tpu.memory_space<vmem>>, %arg1: memref<2x4x8xbf16, #tpu.memory_space<vmem>>, %arg2: memref<8x8xbf16, #tpu.memory_space<vmem>>, %arg3: memref<8x1xf32, #tpu.memory_space<vmem>>, %arg4: memref<8x4xbf16, #tpu.memory_space<vmem>>, %arg5: memref<8x1xf32, #tpu.memory_space<vmem>>, %arg6: memref<2x2x8xbf16, #tpu.memory_space<vmem>>, %arg7: memref<2x1xf32, #tpu.memory_space<vmem>>, %arg8: memref<8x2xbf16, #tpu.memory_space<vmem>>, %arg9: memref<8x1xf32, #tpu.memory_space<vmem>>, %arg10: memref<8x4xbf16, #tpu.memory_space<vmem>>, %arg11: memref<8x1xf32, #tpu.memory_space<vmem>>, %arg12: memref<2x2x8xbf16, #tpu.memory_space<vmem>>, %arg13: memref<2x1xf32, #tpu.memory_space<vmem>>, %arg14: memref<8x2xbf16, #tpu.memory_space<vmem>>, %arg15: memref<8x1xf32, #tpu.memory_space<vmem>>, %arg16: memref<16x8xbf16, #tpu.memory_space<vmem>>, %arg17: memref<16x8xbf16, #tpu.memory_space<vmem>>, %arg18: memref<16x1xf32, #tpu.memory_space<vmem>>, %arg19: memref<4x16xbf16, #tpu.memory_space<vmem>>, %arg20: memref<4x1xf32, #tpu.memory_space<vmem>>, %arg21: memref<8x4xbf16, #tpu.memory_space<vmem>>, %arg22: memref<8x1xf32, #tpu.memory_space<vmem>>, %arg23: memref<8x8xbf16, #tpu.memory_space<vmem>>, %arg24: memref<1x8xf32, #tpu.memory_space<vmem>>, %arg25: memref<8x8xbf16, #tpu.memory_space<vmem>>, %arg26: memref<1x8xf32, #tpu.memory_space<vmem>>, %arg27: memref<8x8xf32, #tpu.memory_space<vmem>>) attributes {dimension_semantics = [], scalar_prefetch = 0 : i64, scratch_operands = 0 : i64, tpu.core_type = #tpu.core_type<tc>} {
    %c0 = arith.constant 0 : index
    %c0_0 = arith.constant 0 : index
    %0 = vector.load %arg0[%c0, %c0_0] : memref<8x8xbf16, #tpu.memory_space<vmem>>, vector<8x8xbf16>
    %c0_1 = arith.constant 0 : index
    %c0_2 = arith.constant 0 : index
    %1 = vector.load %arg7[%c0_1, %c0_2] : memref<2x1xf32, #tpu.memory_space<vmem>>, vector<2x1xf32>
    %c0_3 = arith.constant 0 : index
    %c0_4 = arith.constant 0 : index
    %2 = vector.load %arg4[%c0_3, %c0_4] : memref<8x4xbf16, #tpu.memory_space<vmem>>, vector<8x4xbf16>
    %3 = vector.extract_strided_slice %0 {offsets = [0, 0], sizes = [4, 8], strides = [1, 1]} : vector<8x8xbf16> to vector<4x8xbf16>
    %cst = arith.constant dense<0.000000e+00> : vector<8x8xf32>
    %4 = tpu.matmul %2, %3, %cst {dimension_numbers = #tpu.dot_dimension_numbers<[1], [0], [0], [1], [0, 0, 1, 1], [], []>} : vector<8x4xbf16>, vector<4x8xbf16>, vector<8x8xf32> -> vector<8x8xf32>
    %c0_5 = arith.constant 0 : index
    %c0_6 = arith.constant 0 : index
    %5 = vector.load %arg5[%c0_5, %c0_6] : memref<8x1xf32, #tpu.memory_space<vmem>>, vector<8x1xf32>
    %6 = vector.broadcast %5 : vector<8x1xf32> to vector<8x8xf32>
    %7 = arith.addf %4, %6 : vector<8x8xf32>
    %cst_7 = arith.constant 0.00999999977 : f32
    %8 = vector.broadcast %cst_7 : f32 to vector<8x8xf32>
    %9 = arith.mulf %8, %7 : vector<8x8xf32>
    %10 = arith.maximumf %7, %9 : vector<8x8xf32>
    %c0_8 = arith.constant 0 : index
    %c0_9 = arith.constant 0 : index
    %c0_10 = arith.constant 0 : index
    %11 = vector.load %arg6[%c0_8, %c0_9, %c0_10] : memref<2x2x8xbf16, #tpu.memory_space<vmem>>, vector<1x2x8xbf16>
    %12 = vector.shape_cast %11 : vector<1x2x8xbf16> to vector<2x8xbf16>
    %13 = arith.truncf %10 : vector<8x8xf32> to vector<8x8xbf16>
    %cst_11 = arith.constant dense<0.000000e+00> : vector<2x8xf32>
    %14 = tpu.matmul %12, %13, %cst_11 {dimension_numbers = #tpu.dot_dimension_numbers<[1], [0], [0], [1], [0, 0, 1, 1], [], []>} : vector<2x8xbf16>, vector<8x8xbf16>, vector<2x8xf32> -> vector<2x8xf32>
    %15 = vector.broadcast %1 : vector<2x1xf32> to vector<2x8xf32>
    %16 = arith.addf %15, %14 : vector<2x8xf32>
    %c0_12 = arith.constant 0 : index
    %c0_13 = arith.constant 0 : index
    %17 = vector.load %arg4[%c0_12, %c0_13] : memref<8x4xbf16, #tpu.memory_space<vmem>>, vector<8x4xbf16>
    %18 = vector.extract_strided_slice %0 {offsets = [4, 0], sizes = [4, 8], strides = [1, 1]} : vector<8x8xbf16> to vector<4x8xbf16>
    %cst_14 = arith.constant dense<0.000000e+00> : vector<8x8xf32>
    %19 = tpu.matmul %17, %18, %cst_14 {dimension_numbers = #tpu.dot_dimension_numbers<[1], [0], [0], [1], [0, 0, 1, 1], [], []>} : vector<8x4xbf16>, vector<4x8xbf16>, vector<8x8xf32> -> vector<8x8xf32>
    %c0_15 = arith.constant 0 : index
    %c0_16 = arith.constant 0 : index
    %20 = vector.load %arg5[%c0_15, %c0_16] : memref<8x1xf32, #tpu.memory_space<vmem>>, vector<8x1xf32>
    %21 = vector.broadcast %20 : vector<8x1xf32> to vector<8x8xf32>
    %22 = arith.addf %19, %21 : vector<8x8xf32>
    %cst_17 = arith.constant 0.00999999977 : f32
    %23 = vector.broadcast %cst_17 : f32 to vector<8x8xf32>
    %24 = arith.mulf %23, %22 : vector<8x8xf32>
    %25 = arith.maximumf %22, %24 : vector<8x8xf32>
    %c1 = arith.constant 1 : index
    %c0_18 = arith.constant 0 : index
    %c0_19 = arith.constant 0 : index
    %26 = vector.load %arg6[%c1, %c0_18, %c0_19] : memref<2x2x8xbf16, #tpu.memory_space<vmem>>, vector<1x2x8xbf16>
    %27 = vector.shape_cast %26 : vector<1x2x8xbf16> to vector<2x8xbf16>
    %28 = arith.truncf %25 : vector<8x8xf32> to vector<8x8xbf16>
    %cst_20 = arith.constant dense<0.000000e+00> : vector<2x8xf32>
    %29 = tpu.matmul %27, %28, %cst_20 {dimension_numbers = #tpu.dot_dimension_numbers<[1], [0], [0], [1], [0, 0, 1, 1], [], []>} : vector<2x8xbf16>, vector<8x8xbf16>, vector<2x8xf32> -> vector<2x8xf32>
    %30 = arith.addf %16, %29 : vector<2x8xf32>
    %c0_21 = arith.constant 0 : index
    %c0_22 = arith.constant 0 : index
    %31 = vector.load %arg8[%c0_21, %c0_22] : memref<8x2xbf16, #tpu.memory_space<vmem>>, vector<8x2xbf16>
    %32 = arith.truncf %30 : vector<2x8xf32> to vector<2x8xbf16>
    %cst_23 = arith.constant dense<0.000000e+00> : vector<8x8xf32>
    %33 = tpu.matmul %31, %32, %cst_23 {dimension_numbers = #tpu.dot_dimension_numbers<[1], [0], [0], [1], [0, 0, 1, 1], [], []>} : vector<8x2xbf16>, vector<2x8xbf16>, vector<8x8xf32> -> vector<8x8xf32>
    %c0_24 = arith.constant 0 : index
    %c0_25 = arith.constant 0 : index
    %34 = vector.load %arg9[%c0_24, %c0_25] : memref<8x1xf32, #tpu.memory_space<vmem>>, vector<8x1xf32>
    %35 = vector.broadcast %34 : vector<8x1xf32> to vector<8x8xf32>
    %36 = arith.addf %33, %35 : vector<8x8xf32>
    %c0_26 = arith.constant 0 : index
    %c0_27 = arith.constant 0 : index
    %37 = vector.load %arg13[%c0_26, %c0_27] : memref<2x1xf32, #tpu.memory_space<vmem>>, vector<2x1xf32>
    %c0_28 = arith.constant 0 : index
    %c0_29 = arith.constant 0 : index
    %38 = vector.load %arg10[%c0_28, %c0_29] : memref<8x4xbf16, #tpu.memory_space<vmem>>, vector<8x4xbf16>
    %c0_30 = arith.constant 0 : index
    %c0_31 = arith.constant 0 : index
    %c0_32 = arith.constant 0 : index
    %39 = vector.load %arg1[%c0_30, %c0_31, %c0_32] : memref<2x4x8xbf16, #tpu.memory_space<vmem>>, vector<1x4x8xbf16>
    %40 = vector.shape_cast %39 : vector<1x4x8xbf16> to vector<4x8xbf16>
    %cst_33 = arith.constant dense<0.000000e+00> : vector<8x8xf32>
    %41 = tpu.matmul %38, %40, %cst_33 {dimension_numbers = #tpu.dot_dimension_numbers<[1], [0], [0], [1], [0, 0, 1, 1], [], []>} : vector<8x4xbf16>, vector<4x8xbf16>, vector<8x8xf32> -> vector<8x8xf32>
    %c0_34 = arith.constant 0 : index
    %c0_35 = arith.constant 0 : index
    %42 = vector.load %arg11[%c0_34, %c0_35] : memref<8x1xf32, #tpu.memory_space<vmem>>, vector<8x1xf32>
    %43 = vector.broadcast %42 : vector<8x1xf32> to vector<8x8xf32>
    %44 = arith.addf %41, %43 : vector<8x8xf32>
    %cst_36 = arith.constant 0.00999999977 : f32
    %45 = vector.broadcast %cst_36 : f32 to vector<8x8xf32>
    %46 = arith.mulf %45, %44 : vector<8x8xf32>
    %47 = arith.maximumf %44, %46 : vector<8x8xf32>
    %c0_37 = arith.constant 0 : index
    %c0_38 = arith.constant 0 : index
    %c0_39 = arith.constant 0 : index
    %48 = vector.load %arg12[%c0_37, %c0_38, %c0_39] : memref<2x2x8xbf16, #tpu.memory_space<vmem>>, vector<1x2x8xbf16>
    %49 = vector.shape_cast %48 : vector<1x2x8xbf16> to vector<2x8xbf16>
    %50 = arith.truncf %47 : vector<8x8xf32> to vector<8x8xbf16>
    %cst_40 = arith.constant dense<0.000000e+00> : vector<2x8xf32>
    %51 = tpu.matmul %49, %50, %cst_40 {dimension_numbers = #tpu.dot_dimension_numbers<[1], [0], [0], [1], [0, 0, 1, 1], [], []>} : vector<2x8xbf16>, vector<8x8xbf16>, vector<2x8xf32> -> vector<2x8xf32>
    %52 = vector.broadcast %37 : vector<2x1xf32> to vector<2x8xf32>
    %53 = arith.addf %52, %51 : vector<2x8xf32>
    %c0_41 = arith.constant 0 : index
    %c0_42 = arith.constant 0 : index
    %54 = vector.load %arg10[%c0_41, %c0_42] : memref<8x4xbf16, #tpu.memory_space<vmem>>, vector<8x4xbf16>
    %c1_43 = arith.constant 1 : index
    %c0_44 = arith.constant 0 : index
    %c0_45 = arith.constant 0 : index
    %55 = vector.load %arg1[%c1_43, %c0_44, %c0_45] : memref<2x4x8xbf16, #tpu.memory_space<vmem>>, vector<1x4x8xbf16>
    %56 = vector.shape_cast %55 : vector<1x4x8xbf16> to vector<4x8xbf16>
    %cst_46 = arith.constant dense<0.000000e+00> : vector<8x8xf32>
    %57 = tpu.matmul %54, %56, %cst_46 {dimension_numbers = #tpu.dot_dimension_numbers<[1], [0], [0], [1], [0, 0, 1, 1], [], []>} : vector<8x4xbf16>, vector<4x8xbf16>, vector<8x8xf32> -> vector<8x8xf32>
    %c0_47 = arith.constant 0 : index
    %c0_48 = arith.constant 0 : index
    %58 = vector.load %arg11[%c0_47, %c0_48] : memref<8x1xf32, #tpu.memory_space<vmem>>, vector<8x1xf32>
    %59 = vector.broadcast %58 : vector<8x1xf32> to vector<8x8xf32>
    %60 = arith.addf %57, %59 : vector<8x8xf32>
    %cst_49 = arith.constant 0.00999999977 : f32
    %61 = vector.broadcast %cst_49 : f32 to vector<8x8xf32>
    %62 = arith.mulf %61, %60 : vector<8x8xf32>
    %63 = arith.maximumf %60, %62 : vector<8x8xf32>
    %c1_50 = arith.constant 1 : index
    %c0_51 = arith.constant 0 : index
    %c0_52 = arith.constant 0 : index
    %64 = vector.load %arg12[%c1_50, %c0_51, %c0_52] : memref<2x2x8xbf16, #tpu.memory_space<vmem>>, vector<1x2x8xbf16>
    %65 = vector.shape_cast %64 : vector<1x2x8xbf16> to vector<2x8xbf16>
    %66 = arith.truncf %63 : vector<8x8xf32> to vector<8x8xbf16>
    %cst_53 = arith.constant dense<0.000000e+00> : vector<2x8xf32>
    %67 = tpu.matmul %65, %66, %cst_53 {dimension_numbers = #tpu.dot_dimension_numbers<[1], [0], [0], [1], [0, 0, 1, 1], [], []>} : vector<2x8xbf16>, vector<8x8xbf16>, vector<2x8xf32> -> vector<2x8xf32>
    %68 = arith.addf %53, %67 : vector<2x8xf32>
    %c0_54 = arith.constant 0 : index
    %c0_55 = arith.constant 0 : index
    %69 = vector.load %arg14[%c0_54, %c0_55] : memref<8x2xbf16, #tpu.memory_space<vmem>>, vector<8x2xbf16>
    %70 = arith.truncf %68 : vector<2x8xf32> to vector<2x8xbf16>
    %cst_56 = arith.constant dense<0.000000e+00> : vector<8x8xf32>
    %71 = tpu.matmul %69, %70, %cst_56 {dimension_numbers = #tpu.dot_dimension_numbers<[1], [0], [0], [1], [0, 0, 1, 1], [], []>} : vector<8x2xbf16>, vector<2x8xbf16>, vector<8x8xf32> -> vector<8x8xf32>
    %c0_57 = arith.constant 0 : index
    %c0_58 = arith.constant 0 : index
    %72 = vector.load %arg15[%c0_57, %c0_58] : memref<8x1xf32, #tpu.memory_space<vmem>>, vector<8x1xf32>
    %73 = vector.broadcast %72 : vector<8x1xf32> to vector<8x8xf32>
    %74 = arith.addf %71, %73 : vector<8x8xf32>
    %c0_59 = arith.constant 0 : index
    %c0_60 = arith.constant 0 : index
    %75 = vector.load %arg16[%c0_59, %c0_60] : memref<16x8xbf16, #tpu.memory_space<vmem>>, vector<16x8xbf16>
    %76 = arith.truncf %36 : vector<8x8xf32> to vector<8x8xbf16>
    %cst_61 = arith.constant dense<0.000000e+00> : vector<16x8xf32>
    %77 = tpu.matmul %75, %76, %cst_61 {dimension_numbers = #tpu.dot_dimension_numbers<[1], [0], [0], [1], [0, 0, 1, 1], [], []>} : vector<16x8xbf16>, vector<8x8xbf16>, vector<16x8xf32> -> vector<16x8xf32>
    %c0_62 = arith.constant 0 : index
    %c0_63 = arith.constant 0 : index
    %78 = vector.load %arg17[%c0_62, %c0_63] : memref<16x8xbf16, #tpu.memory_space<vmem>>, vector<16x8xbf16>
    %79 = arith.truncf %74 : vector<8x8xf32> to vector<8x8xbf16>
    %cst_64 = arith.constant dense<0.000000e+00> : vector<16x8xf32>
    %80 = tpu.matmul %78, %79, %cst_64 {dimension_numbers = #tpu.dot_dimension_numbers<[1], [0], [0], [1], [0, 0, 1, 1], [], []>} : vector<16x8xbf16>, vector<8x8xbf16>, vector<16x8xf32> -> vector<16x8xf32>
    %81 = arith.addf %77, %80 : vector<16x8xf32>
    %c0_65 = arith.constant 0 : index
    %c0_66 = arith.constant 0 : index
    %82 = vector.load %arg18[%c0_65, %c0_66] : memref<16x1xf32, #tpu.memory_space<vmem>>, vector<16x1xf32>
    %83 = vector.broadcast %82 : vector<16x1xf32> to vector<16x8xf32>
    %84 = arith.addf %81, %83 : vector<16x8xf32>
    %cst_67 = arith.constant 0.00999999977 : f32
    %85 = vector.broadcast %cst_67 : f32 to vector<16x8xf32>
    %86 = arith.mulf %85, %84 : vector<16x8xf32>
    %87 = arith.maximumf %84, %86 : vector<16x8xf32>
    %c0_68 = arith.constant 0 : index
    %c0_69 = arith.constant 0 : index
    %88 = vector.load %arg19[%c0_68, %c0_69] : memref<4x16xbf16, #tpu.memory_space<vmem>>, vector<4x16xbf16>
    %89 = arith.truncf %87 : vector<16x8xf32> to vector<16x8xbf16>
    %cst_70 = arith.constant dense<0.000000e+00> : vector<4x8xf32>
    %90 = tpu.matmul %88, %89, %cst_70 {dimension_numbers = #tpu.dot_dimension_numbers<[1], [0], [0], [1], [0, 0, 1, 1], [], []>} : vector<4x16xbf16>, vector<16x8xbf16>, vector<4x8xf32> -> vector<4x8xf32>
    %c0_71 = arith.constant 0 : index
    %c0_72 = arith.constant 0 : index
    %91 = vector.load %arg20[%c0_71, %c0_72] : memref<4x1xf32, #tpu.memory_space<vmem>>, vector<4x1xf32>
    %92 = vector.broadcast %91 : vector<4x1xf32> to vector<4x8xf32>
    %93 = arith.addf %90, %92 : vector<4x8xf32>
    %c0_73 = arith.constant 0 : index
    %c0_74 = arith.constant 0 : index
    %94 = vector.load %arg23[%c0_73, %c0_74] : memref<8x8xbf16, #tpu.memory_space<vmem>>, vector<8x8xbf16>
    %95 = arith.truncf %93 : vector<4x8xf32> to vector<4x8xbf16>
    %cst_75 = arith.constant dense<0.000000e+00> : vector<4x8xf32>
    %96 = tpu.matmul %95, %94, %cst_75 {dimension_numbers = #tpu.dot_dimension_numbers<[1], [0], [0], [1], [0, 0, 1, 1], [], []>} : vector<4x8xbf16>, vector<8x8xbf16>, vector<4x8xf32> -> vector<4x8xf32>
    %c0_76 = arith.constant 0 : index
    %c0_77 = arith.constant 0 : index
    %97 = vector.load %arg24[%c0_76, %c0_77] : memref<1x8xf32, #tpu.memory_space<vmem>>, vector<1x8xf32>
    %98 = vector.broadcast %97 : vector<1x8xf32> to vector<4x8xf32>
    %99 = arith.addf %96, %98 : vector<4x8xf32>
    %c0_78 = arith.constant 0 : index
    %c0_79 = arith.constant 0 : index
    %100 = vector.load %arg21[%c0_78, %c0_79] : memref<8x4xbf16, #tpu.memory_space<vmem>>, vector<8x4xbf16>
    %101 = arith.truncf %99 : vector<4x8xf32> to vector<4x8xbf16>
    %cst_80 = arith.constant dense<0.000000e+00> : vector<8x8xf32>
    %102 = tpu.matmul %100, %101, %cst_80 {dimension_numbers = #tpu.dot_dimension_numbers<[1], [0], [0], [1], [0, 0, 1, 1], [], []>} : vector<8x4xbf16>, vector<4x8xbf16>, vector<8x8xf32> -> vector<8x8xf32>
    %c0_81 = arith.constant 0 : index
    %c0_82 = arith.constant 0 : index
    %103 = vector.load %arg22[%c0_81, %c0_82] : memref<8x1xf32, #tpu.memory_space<vmem>>, vector<8x1xf32>
    %104 = vector.broadcast %103 : vector<8x1xf32> to vector<8x8xf32>
    %105 = arith.addf %102, %104 : vector<8x8xf32>
    %c0_83 = arith.constant 0 : index
    %c0_84 = arith.constant 0 : index
    %106 = vector.load %arg2[%c0_83, %c0_84] : memref<8x8xbf16, #tpu.memory_space<vmem>>, vector<8x8xbf16>
    %cst_85 = arith.constant dense<0.000000e+00> : vector<8x8xf32>
    %107 = tpu.matmul %106, %0, %cst_85 {dimension_numbers = #tpu.dot_dimension_numbers<[1], [0], [0], [1], [0, 0, 1, 1], [], []>} : vector<8x8xbf16>, vector<8x8xbf16>, vector<8x8xf32> -> vector<8x8xf32>
    %c0_86 = arith.constant 0 : index
    %c0_87 = arith.constant 0 : index
    %108 = vector.load %arg3[%c0_86, %c0_87] : memref<8x1xf32, #tpu.memory_space<vmem>>, vector<8x1xf32>
    %109 = vector.broadcast %108 : vector<8x1xf32> to vector<8x8xf32>
    %110 = arith.addf %107, %109 : vector<8x8xf32>
    %111 = arith.addf %105, %110 : vector<8x8xf32>
    %c0_88 = arith.constant 0 : index
    %c0_89 = arith.constant 0 : index
    %112 = vector.load %arg25[%c0_88, %c0_89] : memref<8x8xbf16, #tpu.memory_space<vmem>>, vector<8x8xbf16>
    %113 = arith.truncf %111 : vector<8x8xf32> to vector<8x8xbf16>
    %cst_90 = arith.constant dense<0.000000e+00> : vector<8x8xf32>
    %114 = tpu.matmul %113, %112, %cst_90 {dimension_numbers = #tpu.dot_dimension_numbers<[1], [0], [0], [1], [0, 0, 1, 1], [], []>} : vector<8x8xbf16>, vector<8x8xbf16>, vector<8x8xf32> -> vector<8x8xf32>
    %c0_91 = arith.constant 0 : index
    %c0_92 = arith.constant 0 : index
    %115 = vector.load %arg26[%c0_91, %c0_92] : memref<1x8xf32, #tpu.memory_space<vmem>>, vector<1x8xf32>
    %116 = vector.broadcast %115 : vector<1x8xf32> to vector<8x8xf32>
    %117 = arith.addf %114, %116 : vector<8x8xf32>
    %c0_93 = arith.constant 0 : index
    %c0_94 = arith.constant 0 : index
    %118 = vector.load %arg27[%c0_93, %c0_94] : memref<8x8xf32, #tpu.memory_space<vmem>>, vector<8x8xf32>
    tpu.vector_store %arg27[%c0_93, %c0_94], %117 {strides = array<i32>} : memref<8x8xf32, #tpu.memory_space<vmem>>, vector<8x8xf32>,
    return
  }
}

</mosaic_0001>

<llo_original>
// kernel: tile.13
$region0: #{tile.13}
  #allocation0 [shape = 's32[1]{0}', space=sflag, size = 0x4, scoped, tag = 'scoped memory for tile.13']
  %s0 = inlined_call_operand.vmem [shape: f32[4], index: 0, kind: input, shape index: {}]
  %s1 = inlined_call_operand.vmem [shape: f32[2,4], index: 1, kind: output, shape index: {}]
  // Predicated region
  $region2: #{tile.13} parent=0 // pred_check
    _
  $region3: #{tile.13} parent=0 // pred_check_branch
    %3 = sbr.rel (0) target = $region5
  $region4: #{tile.13} parent=0 // pred_region
    _
  $region5: #{tile.13} parent=0 // pred_fallthru
    _
  %v4 = vld [vmem:[%s0] ss:$0 sm:$0xff]
  %5 = vst [vmem:[%s1] sm:$0x3] %v4

// kernel: tile.14
$region0: #{tile.14}
  %s0 = inlined_call_operand.vmem [shape: f32[2,4], index: 0, kind: input, shape index: {}]
  %s1 = inlined_call_operand.vmem [shape: f32[1,8], index: 1, kind: output, shape index: {}]
  $region1: #{tile.14} parent=0
    #allocation0 [shape = 'u8[4096]{0}', space=vmem, size = 0x1000, scoped, tag = 'scoped mem for output reshape']
    #allocation1 [shape = 'u8[4096]{0}', space=vmem, size = 0x1000, scoped, tag = 'scoped mem for input reshape']
    %s3 = ssub.s32 4, 1
    %v4 = vld [vmem:[%s0] sm:%s3]
    %5 = vst [vmem:[#allocation1] sm:%s3] %v4
    %v6 = vld [vmem:[#allocation1] sm:$0x1]
    %vm7 = vcmask 31744
    %8 = vst.msk [vmem:[#allocation0] sm:$0x1] %vm7, %v6
    %s9 = scalar_lea.vmem [#allocation1], 1
    %v10 = vld [vmem:[%s9] sm:$0x1]
    %11 = vrot.lane.b32.xlu0 %v10, 4
    %v12 = vpop.permute.xlu0 %11
    %vm13 = vcmask 64544
    %14 = vst.msk [vmem:[#allocation0] sm:$0x1] %vm13, %v12
    %s16 = ssub.s32 2, 1
    %v17 = vld [vmem:[#allocation0] sm:%s16]
    %s19 = ssub.s32 2, 1
    %20 = vst [vmem:[%s1] sm:%s19] %v17

// kernel: lightts_forward.1
$region0: #{lightts_forward.1}
  #allocation0 [shape = 'u32[]', space=smem, size = 0x4, offset = 0x4, fixed_abs, tag = 'smem constant byte address 0x4 - core index']
  #allocation1 [shape = 'u32[72,128]{1,0:T(1,128)}', space=vmem, size = 0x9000, scoped, tag = 'internal scratch']
  %s0 = inlined_call_operand.vmem [shape: bf16[8,8], index: 0, kind: input, shape index: {}]
  %s1 = inlined_call_operand.vmem [shape: bf16[2,4,8], index: 1, kind: input, shape index: {}]
  %s2 = inlined_call_operand.vmem [shape: bf16[8,8], index: 2, kind: input, shape index: {}]
  %s3 = inlined_call_operand.vmem [shape: f32[8,1], index: 3, kind: input, shape index: {}]
  %s4 = inlined_call_operand.vmem [shape: bf16[8,4], index: 4, kind: input, shape index: {}]
  %s5 = inlined_call_operand.vmem [shape: f32[8,1], index: 5, kind: input, shape index: {}]
  %s6 = inlined_call_operand.vmem [shape: bf16[2,2,8], index: 6, kind: input, shape index: {}]
  %s7 = inlined_call_operand.vmem [shape: f32[2,1], index: 7, kind: input, shape index: {}]
  %s8 = inlined_call_operand.vmem [shape: bf16[8,2], index: 8, kind: input, shape index: {}]
  %s9 = inlined_call_operand.vmem [shape: f32[8,1], index: 9, kind: input, shape index: {}]
  %s10 = inlined_call_operand.vmem [shape: bf16[8,4], index: 10, kind: input, shape index: {}]
  %s11 = inlined_call_operand.vmem [shape: f32[8,1], index: 11, kind: input, shape index: {}]
  %s12 = inlined_call_operand.vmem [shape: bf16[2,2,8], index: 12, kind: input, shape index: {}]
  %s13 = inlined_call_operand.vmem [shape: f32[2,1], index: 13, kind: input, shape index: {}]
  %s14 = inlined_call_operand.vmem [shape: bf16[8,2], index: 14, kind: input, shape index: {}]
  %s15 = inlined_call_operand.vmem [shape: f32[8,1], index: 15, kind: input, shape index: {}]
  %s16 = inlined_call_operand.vmem [shape: bf16[16,8], index: 16, kind: input, shape index: {}]
  %s17 = inlined_call_operand.vmem [shape: bf16[16,8], index: 17, kind: input, shape index: {}]
  %s18 = inlined_call_operand.vmem [shape: f32[16,1], index: 18, kind: input, shape index: {}]
  %s19 = inlined_call_operand.vmem [shape: bf16[4,16], index: 19, kind: input, shape index: {}]
  %s20 = inlined_call_operand.vmem [shape: f32[4,1], index: 20, kind: input, shape index: {}]
  %s21 = inlined_call_operand.vmem [shape: bf16[8,4], index: 21, kind: input, shape index: {}]
  %s22 = inlined_call_operand.vmem [shape: f32[8,1], index: 22, kind: input, shape index: {}]
  %s23 = inlined_call_operand.vmem [shape: bf16[8,8], index: 23, kind: input, shape index: {}]
  %s24 = inlined_call_operand.vmem [shape: f32[1,8], index: 24, kind: input, shape index: {}]
  %s25 = inlined_call_operand.vmem [shape: bf16[8,8], index: 25, kind: input, shape index: {}]
  %s26 = inlined_call_operand.vmem [shape: f32[1,8], index: 26, kind: input, shape index: {}]
  %s27 = inlined_call_operand.vmem [shape: f32[8,8], index: 27, kind: output, shape index: {}]
  %s28 = sld [smem:[#allocation0]]
  $region118: #{lightts_forward.1} parent=0
    _
  %s30 = ssub.s32 1, %s28
  %s31 = scalar_select 0, %s30, %s28
  // Predicated region
  $region2: #{lightts_forward.1} parent=0 // pred_check
    _
  $region3: #{lightts_forward.1} parent=0 // pred_check_branch
    %33 = sbr.rel (0) target = $region5
  $region4: #{lightts_forward.1} parent=0 // pred_region
    _
  $region5: #{lightts_forward.1} parent=0 // pred_fallthru
    _
  // Predicated region
  $region6: #{lightts_forward.1} parent=0 // pred_check
    _
  $region7: #{lightts_forward.1} parent=0 // pred_check_branch
    %35 = sbr.rel (0) target = $region9
  $region8: #{lightts_forward.1} parent=0 // pred_region
    _
  $region9: #{lightts_forward.1} parent=0 // pred_fallthru
    _
  // Predicated region
  $region10: #{lightts_forward.1} parent=0 // pred_check
    _
  $region11: #{lightts_forward.1} parent=0 // pred_check_branch
    %37 = sbr.rel (0) target = $region13
  $region12: #{lightts_forward.1} parent=0 // pred_region
    _
  $region13: #{lightts_forward.1} parent=0 // pred_fallthru
    _
  // Predicated region
  $region14: #{lightts_forward.1} parent=0 // pred_check
    _
  $region15: #{lightts_forward.1} parent=0 // pred_check_branch
    %39 = sbr.rel (0) target = $region17
  $region16: #{lightts_forward.1} parent=0 // pred_region
    _
  $region17: #{lightts_forward.1} parent=0 // pred_fallthru
    _
  // Predicated region
  $region18: #{lightts_forward.1} parent=0 // pred_check
    _
  $region19: #{lightts_forward.1} parent=0 // pred_check_branch
    %41 = sbr.rel (0) target = $region21
  $region20: #{lightts_forward.1} parent=0 // pred_region
    _
  $region21: #{lightts_forward.1} parent=0 // pred_fallthru
    _
  // Predicated region
  $region22: #{lightts_forward.1} parent=0 // pred_check
    _
  $region23: #{lightts_forward.1} parent=0 // pred_check_branch
    %43 = sbr.rel (0) target = $region25
  $region24: #{lightts_forward.1} parent=0 // pred_region
    _
  $region25: #{lightts_forward.1} parent=0 // pred_fallthru
    _
  // Predicated region
  $region26: #{lightts_forward.1} parent=0 // pred_check
    _
  $region27: #{lightts_forward.1} parent=0 // pred_check_branch
    %45 = sbr.rel (0) target = $region29
  $region28: #{lightts_forward.1} parent=0 // pred_region
    _
  $region29: #{lightts_forward.1} parent=0 // pred_fallthru
    _
  // Predicated region
  $region30: #{lightts_forward.1} parent=0 // pred_check
    _
  $region31: #{lightts_forward.1} parent=0 // pred_check_branch
    %47 = sbr.rel (0) target = $region33
  $region32: #{lightts_forward.1} parent=0 // pred_region
    _
  $region33: #{lightts_forward.1} parent=0 // pred_fallthru
    _
  // Predicated region
  $region34: #{lightts_forward.1} parent=0 // pred_check
    _
  $region35: #{lightts_forward.1} parent=0 // pred_check_branch
    %49 = sbr.rel (0) target = $region37
  $region36: #{lightts_forward.1} parent=0 // pred_region
    _
  $region37: #{lightts_forward.1} parent=0 // pred_fallthru
    _
  // Predicated region
  $region38: #{lightts_forward.1} parent=0 // pred_check
    _
  $region39: #{lightts_forward.1} parent=0 // pred_check_branch
    %51 = sbr.rel (0) target = $region41
  $region40: #{lightts_forward.1} parent=0 // pred_region
    _
  $region41: #{lightts_forward.1} parent=0 // pred_fallthru
    _
  // Predicated region
  $region42: #{lightts_forward.1} parent=0 // pred_check
    _
  $region43: #{lightts_forward.1} parent=0 // pred_check_branch
    %53 = sbr.rel (0) target = $region45
  $region44: #{lightts_forward.1} parent=0 // pred_region
    _
  $region45: #{lightts_forward.1} parent=0 // pred_fallthru
    _
  // Predicated region
  $region46: #{lightts_forward.1} parent=0 // pred_check
    _
  $region47: #{lightts_forward.1} parent=0 // pred_check_branch
    %55 = sbr.rel (0) target = $region49
  $region48: #{lightts_forward.1} parent=0 // pred_region
    _
  $region49: #{lightts_forward.1} parent=0 // pred_fallthru
    _
  // Predicated region
  $region50: #{lightts_forward.1} parent=0 // pred_check
    _
  $region51: #{lightts_forward.1} parent=0 // pred_check_branch
    %57 = sbr.rel (0) target = $region53
  $region52: #{lightts_forward.1} parent=0 // pred_region
    _
  $region53: #{lightts_forward.1} parent=0 // pred_fallthru
    _
  // Predicated region
  $region54: #{lightts_forward.1} parent=0 // pred_check
    _
  $region55: #{lightts_forward.1} parent=0 // pred_check_branch
    %59 = sbr.rel (0) target = $region57
  $region56: #{lightts_forward.1} parent=0 // pred_region
    _
  $region57: #{lightts_forward.1} parent=0 // pred_fallthru
    _
  // Predicated region
  $region58: #{lightts_forward.1} parent=0 // pred_check
    _
  $region59: #{lightts_forward.1} parent=0 // pred_check_branch
    %61 = sbr.rel (0) target = $region61
  $region60: #{lightts_forward.1} parent=0 // pred_region
    _
  $region61: #{lightts_forward.1} parent=0 // pred_fallthru
    _
  // Predicated region
  $region62: #{lightts_forward.1} parent=0 // pred_check
    _
  $region63: #{lightts_forward.1} parent=0 // pred_check_branch
    %63 = sbr.rel (0) target = $region65
  $region64: #{lightts_forward.1} parent=0 // pred_region
    _
  $region65: #{lightts_forward.1} parent=0 // pred_fallthru
    _
  // Predicated region
  $region66: #{lightts_forward.1} parent=0 // pred_check
    _
  $region67: #{lightts_forward.1} parent=0 // pred_check_branch
    %65 = sbr.rel (0) target = $region69
  $region68: #{lightts_forward.1} parent=0 // pred_region
    _
  $region69: #{lightts_forward.1} parent=0 // pred_fallthru
    _
  // Predicated region
  $region70: #{lightts_forward.1} parent=0 // pred_check
    _
  $region71: #{lightts_forward.1} parent=0 // pred_check_branch
    %67 = sbr.rel (0) target = $region73
  $region72: #{lightts_forward.1} parent=0 // pred_region
    _
  $region73: #{lightts_forward.1} parent=0 // pred_fallthru
    _
  // Predicated region
  $region74: #{lightts_forward.1} parent=0 // pred_check
    _
  $region75: #{lightts_forward.1} parent=0 // pred_check_branch
    %69 = sbr.rel (0) target = $region77
  $region76: #{lightts_forward.1} parent=0 // pred_region
    _
  $region77: #{lightts_forward.1} parent=0 // pred_fallthru
    _
  // Predicated region
  $region78: #{lightts_forward.1} parent=0 // pred_check
    _
  $region79: #{lightts_forward.1} parent=0 // pred_check_branch
    %71 = sbr.rel (0) target = $region81
  $region80: #{lightts_forward.1} parent=0 // pred_region
    _
  $region81: #{lightts_forward.1} parent=0 // pred_fallthru
    _
  // Predicated region
  $region82: #{lightts_forward.1} parent=0 // pred_check
    _
  $region83: #{lightts_forward.1} parent=0 // pred_check_branch
    %73 = sbr.rel (0) target = $region85
  $region84: #{lightts_forward.1} parent=0 // pred_region
    _
  $region85: #{lightts_forward.1} parent=0 // pred_fallthru
    _
  // Predicated region
  $region86: #{lightts_forward.1} parent=0 // pred_check
    _
  $region87: #{lightts_forward.1} parent=0 // pred_check_branch
    %75 = sbr.rel (0) target = $region89
  $region88: #{lightts_forward.1} parent=0 // pred_region
    _
  $region89: #{lightts_forward.1} parent=0 // pred_fallthru
    _
  // Predicated region
  $region90: #{lightts_forward.1} parent=0 // pred_check
    _
  $region91: #{lightts_forward.1} parent=0 // pred_check_branch
    %77 = sbr.rel (0) target = $region93
  $region92: #{lightts_forward.1} parent=0 // pred_region
    _
  $region93: #{lightts_forward.1} parent=0 // pred_fallthru
    _
  // Predicated region
  $region94: #{lightts_forward.1} parent=0 // pred_check
    _
  $region95: #{lightts_forward.1} parent=0 // pred_check_branch
    %79 = sbr.rel (0) target = $region97
  $region96: #{lightts_forward.1} parent=0 // pred_region
    _
  $region97: #{lightts_forward.1} parent=0 // pred_fallthru
    _
  // Predicated region
  $region98: #{lightts_forward.1} parent=0 // pred_check
    _
  $region99: #{lightts_forward.1} parent=0 // pred_check_branch
    %81 = sbr.rel (0) target = $region101
  $region100: #{lightts_forward.1} parent=0 // pred_region
    _
  $region101: #{lightts_forward.1} parent=0 // pred_fallthru
    _
  // Predicated region
  $region102: #{lightts_forward.1} parent=0 // pred_check
    _
  $region103: #{lightts_forward.1} parent=0 // pred_check_branch
    %83 = sbr.rel (0) target = $region105
  $region104: #{lightts_forward.1} parent=0 // pred_region
    _
  $region105: #{lightts_forward.1} parent=0 // pred_fallthru
    _
  // Predicated region
  $region106: #{lightts_forward.1} parent=0 // pred_check
    _
  $region107: #{lightts_forward.1} parent=0 // pred_check_branch
    %85 = sbr.rel (0) target = $region109
  $region108: #{lightts_forward.1} parent=0 // pred_region
    _
  $region109: #{lightts_forward.1} parent=0 // pred_fallthru
    _
  %v87 = vld [vmem:[%s0] sm:$0xf]
  %v88 = vld [vmem:[%s7] sm:$0x3]
  %v89 = vld [vmem:[%s4] sm:$0xf]
  %v90 = vld [vmem:[%s5] sm:$0xff]
  %92 = vset.pattern.permute.xlu0 0
  %93 = vperm.xlu0 %92, %v90
  %v94 = vpop.permute.xlu0 %93
  %vm96 = vcmask 31744
  %v98 = vsel %vm96, %v89, 0
  %vm100 = vcmask 1041408
  %v102 = vsel %vm100, %v87, 0
  %104 = vmatpush.bf16.msra.mxu0 0
  %105 = vmatpush.bf16.msra.mxu0 0
  %106 = vmatpush.bf16.msra.mxu0 0
  %107 = vmatpush.bf16.msra.mxu0 0
  %108 = vmatpush.bf16.msra.mxu0 0
  %109 = vmatpush.bf16.msra.mxu0 0
  %110 = vmatpush.bf16.msra.mxu0 0
  %111 = vmatpush.bf16.msra.mxu0 %v102
  %112 = vmatmul.bf16.gmra.mxu0 %v98
  %v113 = vpop.f32.mrf.mxu0
  %v114 = vadd.f32 %v94, %v113
  %v115 = vpop.f32.mrf.mxu0
  %116 = vdwg.mxu0
  %v117 = vmul.f32 %v114, 0.01
  %v118 = vmax.f32 %v114, %v117
  %v119 = vld [vmem:[%s6] sm:$0x1]
  %v120 = vpack.c.bf16 %v118, %v118
  %vm121 = vcmask 64512
  %v123 = vsel %vm121, %v119, 0
  %vm125 = vcmask 1043456
  %v127 = vsel %vm125, %v120, 0
  %129 = vmatpush.bf16.msra.mxu0 0
  %130 = vmatpush.bf16.msra.mxu0 0
  %131 = vmatpush.bf16.msra.mxu0 0
  %132 = vmatpush.bf16.msra.mxu0 0
  %133 = vmatpush.bf16.msra.mxu0 0
  %134 = vmatpush.bf16.msra.mxu0 0
  %135 = vmatpush.bf16.msra.mxu0 0
  %136 = vmatpush.bf16.msra.mxu0 %v127
  %137 = vmatmul.bf16.gmra.mxu0 %v123
  %v138 = vpop.f32.mrf.mxu0
  %v139 = vadd.f32 0.0, %v138
  %v140 = vpop.f32.mrf.mxu0
  %141 = vdwg.mxu0
  %143 = vset.pattern.permute.xlu0 0
  %144 = vperm.xlu0 %143, %v88
  %v145 = vpop.permute.xlu0 %144
  %v147 = vadd.f32 %v145, %v139
  %v149 = vunpack.c.l.b16 %v87
  %v150 = vpack.c.b16 %v149, %v149
  %v151 = vrot.slane %v150, 2
  %v153 = vsel %vm100, %v151, 0
  %155 = vmatpush.bf16.msra.mxu0 0
  %156 = vmatpush.bf16.msra.mxu0 0
  %157 = vmatpush.bf16.msra.mxu0 0
  %158 = vmatpush.bf16.msra.mxu0 0
  %159 = vmatpush.bf16.msra.mxu0 0
  %160 = vmatpush.bf16.msra.mxu0 0
  %161 = vmatpush.bf16.msra.mxu0 0
  %162 = vmatpush.bf16.msra.mxu0 %v153
  %163 = vmatmul.bf16.gmra.mxu0 %v98
  %v164 = vpop.f32.mrf.mxu0
  %v165 = vadd.f32 %v94, %v164
  %v166 = vpop.f32.mrf.mxu0
  %167 = vdwg.mxu0
  %v168 = vmul.f32 %v165, 0.01
  %v169 = vmax.f32 %v165, %v168
  %s170 = scalar_lea.vmem %s6, 1
  %v171 = vld [vmem:[%s170] sm:$0x1]
  %v172 = vpack.c.bf16 %v169, %v169
  %v174 = vsel %vm121, %v171, 0
  %v177 = vsel %vm125, %v172, 0
  %179 = vmatpush.bf16.msra.mxu0 0
  %180 = vmatpush.bf16.msra.mxu0 0
  %181 = vmatpush.bf16.msra.mxu0 0
  %182 = vmatpush.bf16.msra.mxu0 0
  %183 = vmatpush.bf16.msra.mxu0 0
  %184 = vmatpush.bf16.msra.mxu0 0
  %185 = vmatpush.bf16.msra.mxu0 0
  %186 = vmatpush.bf16.msra.mxu0 %v177
  %187 = vmatmul.bf16.gmra.mxu0 %v174
  %v188 = vpop.f32.mrf.mxu0
  %v189 = vadd.f32 0.0, %v188
  %v190 = vpop.f32.mrf.mxu0
  %191 = vdwg.mxu0
  %v192 = vadd.f32 %v147, %v189
  %v193 = vld [vmem:[%s8] sm:$0xf]
  %v194 = vpack.c.bf16 %v192, %v192
  %v195 = vld [vmem:[%s9] sm:$0xff]
  %197 = vset.pattern.permute.xlu0 0
  %198 = vperm.xlu0 %197, %v195
  %v199 = vpop.permute.xlu0 %198
  %vm201 = vcmask 15360
  %v203 = vsel %vm201, %v193, 0
  %vm205 = vcmask 1040384
  %v207 = vsel %vm205, %v194, 0
  %209 = vmatpush.bf16.msra.mxu0 0
  %210 = vmatpush.bf16.msra.mxu0 0
  %211 = vmatpush.bf16.msra.mxu0 0
  %212 = vmatpush.bf16.msra.mxu0 0
  %213 = vmatpush.bf16.msra.mxu0 0
  %214 = vmatpush.bf16.msra.mxu0 0
  %215 = vmatpush.bf16.msra.mxu0 0
  %216 = vmatpush.bf16.msra.mxu0 %v207
  %217 = vmatmul.bf16.gmra.mxu0 %v203
  %v218 = vpop.f32.mrf.mxu0
  %v219 = vadd.f32 %v199, %v218
  %v220 = vpop.f32.mrf.mxu0
  %221 = vdwg.mxu0
  %v222 = vld [vmem:[%s13] sm:$0x3]
  %v223 = vld [vmem:[%s10] sm:$0xf]
  %v224 = vld [vmem:[%s1] sm:$0x3]
  %v225 = vld [vmem:[%s11] sm:$0xff]
  %227 = vset.pattern.permute.xlu0 0
  %228 = vperm.xlu0 %227, %v225
  %v229 = vpop.permute.xlu0 %228
  %v232 = vsel %vm96, %v223, 0
  %v235 = vsel %vm100, %v224, 0
  %237 = vmatpush.bf16.msra.mxu0 0
  %238 = vmatpush.bf16.msra.mxu0 0
  %239 = vmatpush.bf16.msra.mxu0 0
  %240 = vmatpush.bf16.msra.mxu0 0
  %241 = vmatpush.bf16.msra.mxu0 0
  %242 = vmatpush.bf16.msra.mxu0 0
  %243 = vmatpush.bf16.msra.mxu0 0
  %244 = vmatpush.bf16.msra.mxu0 %v235
  %245 = vmatmul.bf16.gmra.mxu0 %v232
  %v246 = vpop.f32.mrf.mxu0
  %v247 = vadd.f32 %v229, %v246
  %v248 = vpop.f32.mrf.mxu0
  %249 = vdwg.mxu0
  %v250 = vmul.f32 %v247, 0.01
  %v251 = vmax.f32 %v247, %v250
  %v252 = vld [vmem:[%s12] sm:$0x1]
  %v253 = vpack.c.bf16 %v251, %v251
  %v255 = vsel %vm121, %v252, 0
  %v258 = vsel %vm125, %v253, 0
  %260 = vmatpush.bf16.msra.mxu0 0
  %261 = vmatpush.bf16.msra.mxu0 0
  %262 = vmatpush.bf16.msra.mxu0 0
  %263 = vmatpush.bf16.msra.mxu0 0
  %264 = vmatpush.bf16.msra.mxu0 0
  %265 = vmatpush.bf16.msra.mxu0 0
  %266 = vmatpush.bf16.msra.mxu0 0
  %267 = vmatpush.bf16.msra.mxu0 %v258
  %268 = vmatmul.bf16.gmra.mxu0 %v255
  %v269 = vpop.f32.mrf.mxu0
  %v270 = vadd.f32 0.0, %v269
  %v271 = vpop.f32.mrf.mxu0
  %272 = vdwg.mxu0
  %274 = vset.pattern.permute.xlu0 0
  %275 = vperm.xlu0 %274, %v222
  %v276 = vpop.permute.xlu0 %275
  %v278 = vadd.f32 %v276, %v270
  %s279 = scalar_lea.vmem %s1, 2
  %v280 = vld [vmem:[%s279] sm:$0x3]
  %v282 = vsel %vm100, %v280, 0
  %284 = vmatpush.bf16.msra.mxu0 0
  %285 = vmatpush.bf16.msra.mxu0 0
  %286 = vmatpush.bf16.msra.mxu0 0
  %287 = vmatpush.bf16.msra.mxu0 0
  %288 = vmatpush.bf16.msra.mxu0 0
  %289 = vmatpush.bf16.msra.mxu0 0
  %290 = vmatpush.bf16.msra.mxu0 0
  %291 = vmatpush.bf16.msra.mxu0 %v282
  %292 = vmatmul.bf16.gmra.mxu0 %v232
  %v293 = vpop.f32.mrf.mxu0
  %v294 = vadd.f32 %v229, %v293
  %v295 = vpop.f32.mrf.mxu0
  %296 = vdwg.mxu0
  %v297 = vmul.f32 %v294, 0.01
  %v298 = vmax.f32 %v294, %v297
  %s299 = scalar_lea.vmem %s12, 1
  %v300 = vld [vmem:[%s299] sm:$0x1]
  %v301 = vpack.c.bf16 %v298, %v298
  %v303 = vsel %vm121, %v300, 0
  %v306 = vsel %vm125, %v301, 0
  %308 = vmatpush.bf16.msra.mxu0 0
  %309 = vmatpush.bf16.msra.mxu0 0
  %310 = vmatpush.bf16.msra.mxu0 0
  %311 = vmatpush.bf16.msra.mxu0 0
  %312 = vmatpush.bf16.msra.mxu0 0
  %313 = vmatpush.bf16.msra.mxu0 0
  %314 = vmatpush.bf16.msra.mxu0 0
  %315 = vmatpush.bf16.msra.mxu0 %v306
  %316 = vmatmul.bf16.gmra.mxu0 %v303
  %v317 = vpop.f32.mrf.mxu0
  %v318 = vadd.f32 0.0, %v317
  %v319 = vpop.f32.mrf.mxu0
  %320 = vdwg.mxu0
  %v321 = vadd.f32 %v278, %v318
  %v322 = vld [vmem:[%s14] sm:$0xf]
  %v323 = vpack.c.bf16 %v321, %v321
  %v324 = vld [vmem:[%s15] sm:$0xff]
  %326 = vset.pattern.permute.xlu0 0
  %327 = vperm.xlu0 %326, %v324
  %v328 = vpop.permute.xlu0 %327
  %v331 = vsel %vm201, %v322, 0
  %v334 = vsel %vm205, %v323, 0
  %336 = vmatpush.bf16.msra.mxu0 0
  %337 = vmatpush.bf16.msra.mxu0 0
  %338 = vmatpush.bf16.msra.mxu0 0
  %339 = vmatpush.bf16.msra.mxu0 0
  %340 = vmatpush.bf16.msra.mxu0 0
  %341 = vmatpush.bf16.msra.mxu0 0
  %342 = vmatpush.bf16.msra.mxu0 0
  %343 = vmatpush.bf16.msra.mxu0 %v334
  %344 = vmatmul.bf16.gmra.mxu0 %v331
  %v345 = vpop.f32.mrf.mxu0
  %v346 = vadd.f32 %v328, %v345
  %v347 = vpop.f32.mrf.mxu0
  %348 = vdwg.mxu0
  %v349 = vld [vmem:[%s16] sm:$0xf]
  %v350 = vld [vmem:[%s16 + $0x4] sm:$0xf]
  %v351 = vpack.c.bf16 %v219, %v219
  %v352 = vld [vmem:[%s17] sm:$0xf]
  %v353 = vld [vmem:[%s17 + $0x4] sm:$0xf]
  %v354 = vpack.c.bf16 %v346, %v346
  %v357 = vunpack.c.l.b16 %v352
  %v358 = vunpack.c.l.b16 %v353
  %v359 = vpack.c.b16 %v358, %v357
  %v361 = vsel %vm121, %v359, 0
  %v364 = vsel %vm125, %v354, 0
  %366 = vmatpush.bf16.msra.mxu0 0
  %367 = vmatpush.bf16.msra.mxu0 0
  %368 = vmatpush.bf16.msra.mxu0 0
  %369 = vmatpush.bf16.msra.mxu0 0
  %370 = vmatpush.bf16.msra.mxu0 0
  %371 = vmatpush.bf16.msra.mxu0 0
  %372 = vmatpush.bf16.msra.mxu0 0
  %373 = vmatpush.bf16.msra.mxu0 %v364
  %374 = vmatmul.bf16.gmra.mxu0 %v361
  %v375 = vpop.f32.mrf.mxu0
  %v376 = vadd.f32 0.0, %v375
  %v377 = vpop.f32.mrf.mxu0
  %v378 = vadd.f32 0.0, %v377
  %379 = vdwg.mxu0
  %v382 = vunpack.c.l.b16 %v349
  %v383 = vunpack.c.l.b16 %v350
  %v384 = vpack.c.b16 %v383, %v382
  %v386 = vsel %vm121, %v384, 0
  %v389 = vsel %vm125, %v351, 0
  %391 = vmatpush.bf16.msra.mxu0 0
  %392 = vmatpush.bf16.msra.mxu0 0
  %393 = vmatpush.bf16.msra.mxu0 0
  %394 = vmatpush.bf16.msra.mxu0 0
  %395 = vmatpush.bf16.msra.mxu0 0
  %396 = vmatpush.bf16.msra.mxu0 0
  %397 = vmatpush.bf16.msra.mxu0 0
  %398 = vmatpush.bf16.msra.mxu0 %v389
  %399 = vmatmul.bf16.gmra.mxu0 %v386
  %v400 = vpop.f32.mrf.mxu0
  %v401 = vadd.f32 %v376, %v400
  %v402 = vpop.f32.mrf.mxu0
  %v403 = vadd.f32 %v378, %v402
  %404 = vdwg.mxu0
  %v405 = vld [vmem:[%s18] sm:$0xff]
  %v406 = vld [vmem:[%s18 + $0x8] sm:$0xff]
  %408 = vset.pattern.permute.xlu0 0
  %409 = vperm.xlu0 %408, %v405
  %v410 = vpop.permute.xlu0 %409
  %413 = vset.pattern.permute.xlu0 0
  %414 = vperm.xlu0 %413, %v406
  %v415 = vpop.permute.xlu0 %414
  %v417 = vadd.f32 %v401, %v410
  %v418 = vadd.f32 %v403, %v415
  %v419 = vmul.f32 %v417, 0.01
  %v420 = vmul.f32 %v418, 0.01
  %v421 = vmax.f32 %v417, %v419
  %v422 = vmax.f32 %v418, %v420
  %v423 = vld [vmem:[%s19] sm:$0x3]
  %v424 = vpack.c.bf16 %v422, %v421
  %v425 = vld [vmem:[%s20] sm:$0xf]
  %427 = vset.pattern.permute.xlu0 0
  %428 = vperm.xlu0 %427, %v425
  %v429 = vpop.permute.xlu0 %428
  %vm431 = vcmask 130048
  %v433 = vsel %vm431, %v423, 0
  %435 = vmatpush.bf16.msra.mxu0 0
  %436 = vmatpush.bf16.msra.mxu0 0
  %437 = vmatpush.bf16.msra.mxu0 0
  %438 = vmatpush.bf16.msra.mxu0 0
  %439 = vmatpush.bf16.msra.mxu0 0
  %440 = vmatpush.bf16.msra.mxu0 0
  %441 = vmatpush.bf16.msra.mxu0 0
  %442 = vmatpush.bf16.msra.mxu0 %v424
  %443 = vmatmul.bf16.gmra.mxu0 %v433
  %v444 = vpop.f32.mrf.mxu0
  %v445 = vadd.f32 %v429, %v444
  %v446 = vpop.f32.mrf.mxu0
  %447 = vdwg.mxu0
  %v448 = vld [vmem:[%s23] sm:$0xf]
  %v449 = vpack.c.bf16 %v445, %v445
  %v450 = vld [vmem:[%s24] sm:$0x1]
  %v452 = vperm.slane %v450, 0
  %v455 = vsel %vm121, %v449, 0
  %v458 = vsel %vm125, %v448, 0
  %460 = vmatpush.bf16.msra.mxu0 0
  %461 = vmatpush.bf16.msra.mxu0 0
  %462 = vmatpush.bf16.msra.mxu0 0
  %463 = vmatpush.bf16.msra.mxu0 0
  %464 = vmatpush.bf16.msra.mxu0 0
  %465 = vmatpush.bf16.msra.mxu0 0
  %466 = vmatpush.bf16.msra.mxu0 0
  %467 = vmatpush.bf16.msra.mxu0 %v458
  %468 = vmatmul.bf16.gmra.mxu0 %v455
  %v469 = vpop.f32.mrf.mxu0
  %v470 = vadd.f32 %v452, %v469
  %v471 = vpop.f32.mrf.mxu0
  %472 = vdwg.mxu0
  %v473 = vld [vmem:[%s21] sm:$0xf]
  %v474 = vpack.c.bf16 %v470, %v470
  %v475 = vld [vmem:[%s22] sm:$0xff]
  %477 = vset.pattern.permute.xlu0 0
  %478 = vperm.xlu0 %477, %v475
  %v479 = vpop.permute.xlu0 %478
  %v482 = vsel %vm96, %v473, 0
  %v485 = vsel %vm100, %v474, 0
  %487 = vmatpush.bf16.msra.mxu0 0
  %488 = vmatpush.bf16.msra.mxu0 0
  %489 = vmatpush.bf16.msra.mxu0 0
  %490 = vmatpush.bf16.msra.mxu0 0
  %491 = vmatpush.bf16.msra.mxu0 0
  %492 = vmatpush.bf16.msra.mxu0 0
  %493 = vmatpush.bf16.msra.mxu0 0
  %494 = vmatpush.bf16.msra.mxu0 %v485
  %495 = vmatmul.bf16.gmra.mxu0 %v482
  %v496 = vpop.f32.mrf.mxu0
  %v497 = vadd.f32 %v479, %v496
  %v498 = vpop.f32.mrf.mxu0
  %499 = vdwg.mxu0
  %v500 = vld [vmem:[%s2] sm:$0xf]
  %v501 = vld [vmem:[%s3] sm:$0xff]
  %503 = vset.pattern.permute.xlu0 0
  %504 = vperm.xlu0 %503, %v501
  %v505 = vpop.permute.xlu0 %504
  %v508 = vsel %vm121, %v500, 0
  %v510 = vsel %vm125, %v87, 0
  %512 = vmatpush.bf16.msra.mxu0 0
  %513 = vmatpush.bf16.msra.mxu0 0
  %514 = vmatpush.bf16.msra.mxu0 0
  %515 = vmatpush.bf16.msra.mxu0 0
  %516 = vmatpush.bf16.msra.mxu0 0
  %517 = vmatpush.bf16.msra.mxu0 0
  %518 = vmatpush.bf16.msra.mxu0 0
  %519 = vmatpush.bf16.msra.mxu0 %v510
  %520 = vmatmul.bf16.gmra.mxu0 %v508
  %v521 = vpop.f32.mrf.mxu0
  %v522 = vadd.f32 %v505, %v521
  %v523 = vpop.f32.mrf.mxu0
  %524 = vdwg.mxu0
  %v525 = vadd.f32 %v497, %v522
  %v526 = vld [vmem:[%s25] sm:$0xf]
  %v527 = vpack.c.bf16 %v525, %v525
  %v528 = vld [vmem:[%s26] sm:$0x1]
  %v530 = vperm.slane %v528, 0
  %v533 = vsel %vm121, %v527, 0
  %v536 = vsel %vm125, %v526, 0
  %538 = vmatpush.bf16.msra.mxu0 0
  %539 = vmatpush.bf16.msra.mxu0 0
  %540 = vmatpush.bf16.msra.mxu0 0
  %541 = vmatpush.bf16.msra.mxu0 0
  %542 = vmatpush.bf16.msra.mxu0 0
  %543 = vmatpush.bf16.msra.mxu0 0
  %544 = vmatpush.bf16.msra.mxu0 0
  %545 = vmatpush.bf16.msra.mxu0 %v536
  %546 = vmatmul.bf16.gmra.mxu0 %v533
  %v547 = vpop.f32.mrf.mxu0
  %v548 = vadd.f32 %v530, %v547
  %v549 = vpop.f32.mrf.mxu0
  %550 = vdwg.mxu0
  %551 = vst.msk [vmem:[%s27] sm:$0xff] %vm121, %v548
  // Predicated region
  $region110: #{lightts_forward.1} parent=0 // pred_check
    _
  $region111: #{lightts_forward.1} parent=0 // pred_check_branch
    %553 = sbr.rel (0) target = $region113
  $region112: #{lightts_forward.1} parent=0 // pred_region
    _
  $region113: #{lightts_forward.1} parent=0 // pred_fallthru
    _
  // Predicated region
  $region114: #{lightts_forward.1} parent=0 // pred_check
    _
  $region115: #{lightts_forward.1} parent=0 // pred_check_branch
    %555 = sbr.rel (0) target = $region117
  $region116: #{lightts_forward.1} parent=0 // pred_region
    _
  $region117: #{lightts_forward.1} parent=0 // pred_fallthru
    _

</llo_original>
